<compile_context>
chip_gen: v7x
topology: tpu7x:2x2x1
jax: 0.10.0
libtpu: 0.0.40
codegen_flags: <defaults>
</compile_context>

<pallas_src>
import math
import functools

import jax
import jax.numpy as jnp
from jax.experimental import pallas as pl
from jax.experimental.pallas import tpu as pltpu


def _round_up(x, m):
    return ((x + m - 1) // m) * m


def _vmem_capacity_bytes():
    try:
        return int(pltpu.get_tpu_info().vmem_capacity_bytes)
    except Exception:
        return 64 << 20  # conservative (v7x-sized) fallback


def _pick_tile(dim, max_tile, align, min_tile=256):
    """Pick (tile, padded_dim) with tile % align == 0 and padded_dim % tile == 0.

    Prefers large tiles and tolerates ~2% zero padding over shrinking the
    tile: tiny tiles multiply grid-step overhead (~0.35 us each) and
    under-feed the 256-wide MXU.
    """
    dim_al = _round_up(max(dim, align), align)
    if dim_al <= max_tile:
        return dim_al, dim_al
    min_tile = max(min(min_tile, max_tile), align)
    best_padded = None
    for t in range(max_tile, min_tile - 1, -align):
        padded = _round_up(dim_al, t)
        if best_padded is None or padded < best_padded:
            best_padded = padded
    # Among tiles whose padding is within ~2% of the best, take the largest.
    for t in range(max_tile, min_tile - 1, -align):
        padded = _round_up(dim_al, t)
        if padded <= int(best_padded * 1.02) + align:
            return t, padded
    return min_tile, _round_up(dim_al, min_tile)


# -------------------------- kernels --------------------------

def _matmul_kernel_single_k(x_ref, w_ref, o_ref):
    """Single K step: no accumulation state needed at all."""
    o_ref[...] = jnp.dot(
        x_ref[...], w_ref[...], preferred_element_type=jnp.float32
    ).astype(o_ref.dtype)


def _matmul_kernel_f32_out(x_ref, w_ref, o_ref):
    """f32 output: accumulate directly into the k-resident output tile."""
    @pl.when(pl.program_id(2) == 0)
    def _():
        o_ref[...] = jnp.zeros_like(o_ref)

    o_ref[...] += jnp.dot(
        x_ref[...], w_ref[...], preferred_element_type=jnp.float32
    )


def _matmul_kernel_acc(x_ref, w_ref, o_ref, acc_ref):
    """Generic path (narrow output dtype): f32 VMEM accumulator scratch."""
    @pl.when(pl.program_id(2) == 0)
    def _():
        acc_ref[...] = jnp.zeros_like(acc_ref)

    acc_ref[...] += jnp.dot(
        x_ref[...], w_ref[...], preferred_element_type=jnp.float32
    )

    @pl.when(pl.program_id(2) == pl.num_programs(2) - 1)
    def _():
        o_ref[...] = acc_ref[...].astype(o_ref.dtype)


def _pallas_matmul(x2d, w_t, out_dtype, tm, tn, tk, vmem_limit_bytes):
    M, K = x2d.shape
    K2, N = w_t.shape
    assert K == K2
    assert M % tm == 0 and N % tn == 0 and K % tk == 0
    ni, nj, nk = M // tm, N // tn, K // tk

    out_is_f32 = jnp.dtype(out_dtype) == jnp.dtype(jnp.float32)
    if nk == 1:
        kernel, scratch_shapes = _matmul_kernel_single_k, []
    elif out_is_f32:
        kernel, scratch_shapes = _matmul_kernel_f32_out, []
    else:
        kernel, scratch_shapes = _matmul_kernel_acc, [pltpu.VMEM((tm, tn), jnp.float32)]

    # Put the grid axis with more blocks first so megacore sharding (v7x has
    # 2 TensorCores) always has work, even when M has a single block (decode).
    if nj > ni:
        grid = (nj, ni, nk)
        x_spec = pl.BlockSpec((tm, tk), lambda j, i, k: (i, k))
        w_spec = pl.BlockSpec((tk, tn), lambda j, i, k: (k, j))
        o_spec = pl.BlockSpec((tm, tn), lambda j, i, k: (i, j))
    else:
        grid = (ni, nj, nk)
        x_spec = pl.BlockSpec((tm, tk), lambda i, j, k: (i, k))
        w_spec = pl.BlockSpec((tk, tn), lambda i, j, k: (k, j))
        o_spec = pl.BlockSpec((tm, tn), lambda i, j, k: (i, j))

    cost = pl.CostEstimate(
        flops=2 * M * N * K,
        bytes_accessed=(
            M * K * x2d.dtype.itemsize
            + K * N * w_t.dtype.itemsize
            + M * N * jnp.dtype(out_dtype).itemsize
        ),
        transcendentals=0,
    )

    return pl.pallas_call(
        kernel,
        out_shape=jax.ShapeDtypeStruct((M, N), out_dtype),
        grid_spec=pltpu.PrefetchScalarGridSpec(
            num_scalar_prefetch=0,
            grid=grid,
            in_specs=[x_spec, w_spec],
            out_specs=o_spec,
            scratch_shapes=scratch_shapes,
        ),
        compiler_params=pltpu.CompilerParams(
            dimension_semantics=("parallel", "parallel", "arbitrary"),
            vmem_limit_bytes=vmem_limit_bytes,
        ),
        cost_estimate=cost,
    )(x2d, w_t)


@functools.partial(
    jax.jit,
    static_argnames=("tm", "tn", "tk", "Mp", "Kp", "N",
                     "out_dtype", "compute_dtype", "vmem_limit_bytes"),
)
def _forward(hidden_states, w_t_padded, *, tm, tn, tk, Mp, Kp, N,
             out_dtype, compute_dtype, vmem_limit_bytes):
    s, b, h = hidden_states.shape
    M = s * b

    x2d = hidden_states.reshape(M, h).astype(compute_dtype)
    # Zero-pad activations only (small); weight is pre-padded in __init__.
    if Mp != M or Kp != h:
        x2d = jnp.pad(x2d, ((0, Mp - M), (0, Kp - h)))

    out = _pallas_matmul(x2d, w_t_padded, out_dtype, tm, tn, tk, vmem_limit_bytes)
    out = out[:M, :N]
    return out.reshape(s, b, N)


class ParallelLinearPallas:
    """JAX/Pallas equivalent of megatron ParallelLinear (column-parallel, bias=False)."""

    def __init__(self, hidden_size, padded_vocab_size, key,
                 param_dtype=jnp.float32, compute_dtype=jnp.bfloat16):
        self.hidden_size = hidden_size
        self.padded_vocab_size = padded_vocab_size
        self.compute_dtype = compute_dtype
        self.out_dtype = param_dtype

        # --- generation-aware tile / VMEM policy ---
        vmem_cap = _vmem_capacity_bytes()
        big_vmem = vmem_cap >= (96 << 20)        # v5e / v6e: 128 MiB; v7x: 64 MiB
        self._tm_cap = 1024 if big_vmem else 512
        tn_cap = 1024
        tk_cap = 4096 if big_vmem else 2048
        self._vmem_limit = (96 << 20) if big_vmem else (40 << 20)

        # tk / tn depend only on (hidden, vocab): fix them here so the weight
        # can be padded exactly once.
        self._tk, self._Kp = _pick_tile(hidden_size, tk_cap, 128)
        self._tn, self._Np = _pick_tile(padded_vocab_size, tn_cap, 128)

        # xavier_normal_ on weight of shape [padded_vocab_size, hidden_size]
        std = math.sqrt(2.0 / (hidden_size + padded_vocab_size))
        w = std * jax.random.normal(
            key, (padded_vocab_size, hidden_size), dtype=jnp.float32
        )
        self.weight = w.astype(param_dtype)

        # Pre-transpose, cast to bf16 and zero-pad to (Kp, Np) ONCE.  Doing
        # this per forward would re-materialize the full LM-head weight in
        # HBM on every call.
        w_t = self.weight.T.astype(compute_dtype)          # [hidden, vocab]
        if (self._Kp, self._Np) != w_t.shape:
            w_t = jnp.pad(w_t, ((0, self._Kp - hidden_size),
                                (0, self._Np - padded_vocab_size)))
        self.weight_t_padded = jax.block_until_ready(w_t)
        # TODO(synk): mup_rescale_parameters and the tensor-model-parallel
        # gather are identity in this single-device setting and are omitted.

    def __call__(self, hidden_states):
        # hidden_states: [s, b, h]
        s, b, h = hidden_states.shape
        assert h == self.hidden_size
        M = s * b

        # tm per call (token-count dependent), aligned to 16 for bf16 sublane
        # packing; large M gets the full generation-dependent cap.
        tm, Mp = _pick_tile(M, self._tm_cap, 16)

        # Safety net: keep the double-buffered working set inside the VMEM
        # budget by shrinking tk only (tm/tn reuse dominates HBM traffic).
        tk, Kp, tn = self._tk, self._Kp, self._tn
        cbytes = jnp.dtype(self.compute_dtype).itemsize
        obytes = jnp.dtype(self.out_dtype).itemsize

        def working_set(tk_):
            return (2 * (tm * tk_ + tk_ * tn) * cbytes + 3 * tm * tn * obytes)

        while (working_set(tk) > self._vmem_limit - (4 << 20)
               and tk > 512 and tk % 2 == 0 and Kp % (tk // 2) == 0):
            tk //= 2

        output = _forward(
            hidden_states, self.weight_t_padded,
            tm=tm, tn=tn, tk=tk, Mp=Mp, Kp=Kp, N=self.padded_vocab_size,
            out_dtype=self.out_dtype, compute_dtype=self.compute_dtype,
            vmem_limit_bytes=self._vmem_limit,
        )
        # ColumnParallelLinear returns (output, output_bias); bias=False -> None
        return output, None


if __name__ == "__main__":
    # Small shapes consistent with the module: seq=8, batch=2,
    # hidden_size=128, padded_vocab_size=512.
    seq, batch, hidden, vocab = 8, 2, 128, 512

    key = jax.random.PRNGKey(0)
    k_w, k_x = jax.random.split(key)

    layer = ParallelLinearPallas(hidden, vocab, k_w)
    hidden_states = jax.random.normal(k_x, (seq, batch, hidden), dtype=jnp.float32)

    out, bias = layer(hidden_states)
    out = jax.block_until_ready(out)

    # Sanity check against a plain-JAX reference on the same bf16 inputs
    # (f32 accumulation), which is what the kernel computes.
    x2d_bf16 = hidden_states.reshape(-1, hidden).astype(jnp.bfloat16)
    w_t_bf16 = layer.weight.T.astype(jnp.bfloat16)
    ref = jnp.dot(x2d_bf16, w_t_bf16, preferred_element_type=jnp.float32)
    ref = ref.reshape(seq, batch, vocab)

    assert out.shape == (seq, batch, vocab)
    assert out.dtype == jnp.float32
    assert bias is None
    assert jnp.allclose(out, ref, atol=1e-3, rtol=1e-3)

    print("KERNEL_OK")
</pallas_src>

<mosaic_0001>
module attributes {stable_mosaic.version = 11 : i64} {
  func.func @_matmul_kernel_single_k(%arg0: i32, %arg1: i32, %arg2: i32, %arg3: memref<16x128xbf16, #tpu.memory_space<vmem>>, %arg4: memref<128x512xbf16, #tpu.memory_space<vmem>>, %arg5: memref<16x512xf32, #tpu.memory_space<vmem>>) attributes {dimension_semantics = [#tpu.dimension_semantics<parallel>, #tpu.dimension_semantics<parallel>, #tpu.dimension_semantics<arbitrary>], iteration_bounds = array<i64: 1, 1, 1>, scalar_prefetch = 0 : i64, scratch_operands = 0 : i64, tpu.core_type = #tpu.core_type<tc>, window_params = [{transform_indices = @transform_0, window_bounds = array<i64: 16, 128>}, {transform_indices = @transform_1, window_bounds = array<i64: 128, 512>}, {transform_indices = @transform_2, window_bounds = array<i64: 16, 512>}]} {
    %c0 = arith.constant 0 : index
    %c0_0 = arith.constant 0 : index
    %0 = vector.load %arg3[%c0, %c0_0] : memref<16x128xbf16, #tpu.memory_space<vmem>>, vector<16x128xbf16>
    %c0_1 = arith.constant 0 : index
    %c0_2 = arith.constant 0 : index
    %1 = vector.load %arg4[%c0_1, %c0_2] : memref<128x512xbf16, #tpu.memory_space<vmem>>, vector<128x512xbf16>
    %cst = arith.constant dense<0.000000e+00> : vector<16x512xf32>
    %2 = tpu.matmul %0, %1, %cst {dimension_numbers = #tpu.dot_dimension_numbers<[1], [0], [0], [1], [0, 0, 1, 1], [], []>} : vector<16x128xbf16>, vector<128x512xbf16>, vector<16x512xf32> -> vector<16x512xf32>
    %c0_3 = arith.constant 0 : index
    %c0_4 = arith.constant 0 : index
    %3 = vector.load %arg5[%c0_3, %c0_4] : memref<16x512xf32, #tpu.memory_space<vmem>>, vector<16x512xf32>
    tpu.vector_store %arg5[%c0_3, %c0_4], %2 {strides = array<i32>} : memref<16x512xf32, #tpu.memory_space<vmem>>, vector<16x512xf32>,
    return
  }
  func.func @transform_0(%arg0: i32, %arg1: i32, %arg2: i32) -> (i32, i32) {
    %c0_i32 = arith.constant 0 : i32
    return %arg0, %arg2 : i32, i32
  }
  func.func @transform_1(%arg0: i32, %arg1: i32, %arg2: i32) -> (i32, i32) {
    %c0_i32 = arith.constant 0 : i32
    return %arg2, %arg1 : i32, i32
  }
  func.func @transform_2(%arg0: i32, %arg1: i32, %arg2: i32) -> (i32, i32) {
    %c0_i32 = arith.constant 0 : i32
    return %arg0, %arg1 : i32, i32
  }
}

</mosaic_0001>

<llo_original>
// kernel: _forward.1
$region0: #{_forward.1}
  #allocation0 [shape = 'u32[]', space=smem, size = 0x4, offset = 0x4, fixed_abs, tag = 'smem constant byte address 0x4 - core index']
  #allocation1 [shape = 'u32[144,128]{1,0:T(1,128)}', space=vmem, size = 0x12000, scoped, tag = 'internal scratch']
  %s0 = inlined_call_operand.vmem [shape: bf16[16,128], index: 0, kind: input, shape index: {}]
  %s1 = inlined_call_operand.hbm [shape: bf16[128,512], index: 1, kind: input, shape index: {}]
  %s2 = inlined_call_operand.vmem [shape: f32[16,512], index: 2, kind: output, shape index: {}]
  %s3 = sld [smem:[#allocation0]]
  $region22: #{_forward.1} parent=0
    _
  %s5 = ssub.s32 1, %s3
  %s6 = scalar_select 0, %s5, %s3
  $region1: #{_forward.1} parent=0
    #allocation2 [shape = 'u8[131072]{0}', space=vmem, size = 0x20000, scoped, tag = 'input window, operand 1, single buffered']
    #allocation3 [shape = 's32[1]{0}', space=sflag, size = 0x4, scoped, tag = 'scoped memory for _forward.1']
    %7 = vsyncpa [#allocation3], 0
    // Predicated region
    $region2: #{_forward.1} parent=1 // pred_check
      _
    $region3: #{_forward.1} parent=1 // pred_check_branch
      %9 = sbr.rel (0) target = $region5
    $region4: #{_forward.1} parent=1 // pred_region
      _
    $region5: #{_forward.1} parent=1 // pred_fallthru
      _
    // Predicated region
    $region6: #{_forward.1} parent=1 // pred_check
      _
    $region7: #{_forward.1} parent=1 // pred_check_branch
      %11 = sbr.rel (0) target = $region9
    $region8: #{_forward.1} parent=1 // pred_region
      %s13 = ssub.s32 4096, 4096
      %14 = vsyncadd [#allocation3], %s13
      %s15 = sshll.u32 [#allocation2], 4
      %s16 = int_to_ptr.vmem [resolvable:$true] %s15
      %21 = dma.hbm_to_vmem [thread:$0]  %s1, 4096, %s16, [#allocation3], 256, 256, 16
    $region9: #{_forward.1} parent=1 // pred_fallthru
      _
    // Predicated region
    $region10: #{_forward.1} parent=1 // pred_check
      _
    $region11: #{_forward.1} parent=1 // pred_check_branch
      %23 = sbr.rel (0) target = $region13
    $region12: #{_forward.1} parent=1 // pred_region
      %24 = dma.done [#allocation3], 4096
    $region13: #{_forward.1} parent=1 // pred_fallthru
      _
    %v26 = vld [vmem:[%s0] sm:$0xf]
    %v27 = vld [vmem:[%s0 + $0x4] sm:$0xf]
    %v28 = vld [vmem:[#allocation2] sm:$0xff]
    %v29 = vld [vmem:[#allocation2 + $0x8] sm:$0xff]
    %v30 = vld [vmem:[#allocation2 + $0x10] sm:$0xff]
    %v31 = vld [vmem:[#allocation2 + $0x18] sm:$0xff]
    %v32 = vld [vmem:[#allocation2 + $0x20] sm:$0xff]
    %v33 = vld [vmem:[#allocation2 + $0x28] sm:$0xff]
    %v34 = vld [vmem:[#allocation2 + $0x30] sm:$0xff]
    %v35 = vld [vmem:[#allocation2 + $0x38] sm:$0xff]
    %v36 = vld [vmem:[#allocation2 + $0x40] sm:$0xff]
    %v37 = vld [vmem:[#allocation2 + $0x48] sm:$0xff]
    %v38 = vld [vmem:[#allocation2 + $0x50] sm:$0xff]
    %v39 = vld [vmem:[#allocation2 + $0x58] sm:$0xff]
    %v40 = vld [vmem:[#allocation2 + $0x60] sm:$0xff]
    %v41 = vld [vmem:[#allocation2 + $0x68] sm:$0xff]
    %v42 = vld [vmem:[#allocation2 + $0x70] sm:$0xff]
    %v43 = vld [vmem:[#allocation2 + $0x78] sm:$0xff]
    %v44 = vld [vmem:[#allocation2 + $0x80] sm:$0xff]
    %v45 = vld [vmem:[#allocation2 + $0x88] sm:$0xff]
    %v46 = vld [vmem:[#allocation2 + $0x90] sm:$0xff]
    %v47 = vld [vmem:[#allocation2 + $0x98] sm:$0xff]
    %v48 = vld [vmem:[#allocation2 + $0xa0] sm:$0xff]
    %v49 = vld [vmem:[#allocation2 + $0xa8] sm:$0xff]
    %v50 = vld [vmem:[#allocation2 + $0xb0] sm:$0xff]
    %v51 = vld [vmem:[#allocation2 + $0xb8] sm:$0xff]
    %v52 = vld [vmem:[#allocation2 + $0xc0] sm:$0xff]
    %v53 = vld [vmem:[#allocation2 + $0xc8] sm:$0xff]
    %v54 = vld [vmem:[#allocation2 + $0xd0] sm:$0xff]
    %v55 = vld [vmem:[#allocation2 + $0xd8] sm:$0xff]
    %v56 = vld [vmem:[#allocation2 + $0xe0] sm:$0xff]
    %v57 = vld [vmem:[#allocation2 + $0xe8] sm:$0xff]
    %v58 = vld [vmem:[#allocation2 + $0xf0] sm:$0xff]
    %v59 = vld [vmem:[#allocation2 + $0xf8] sm:$0xff]
    %v62 = vunpack.c.l.b16 %v26
    %v63 = vunpack.c.l.b16 %v27
    %v64 = vpack.c.b16 %v63, %v62
    %v98 = vunpack.c.l.b16 %v28
    %v99 = vunpack.c.h.b16 %v28
    %v100 = vunpack.c.l.b16 %v29
    %v101 = vunpack.c.h.b16 %v29
    %v102 = vunpack.c.l.b16 %v30
    %v103 = vunpack.c.h.b16 %v30
    %v104 = vunpack.c.l.b16 %v31
    %v105 = vunpack.c.h.b16 %v31
    %v106 = vunpack.c.l.b16 %v32
    %v107 = vunpack.c.h.b16 %v32
    %v108 = vunpack.c.l.b16 %v33
    %v109 = vunpack.c.h.b16 %v33
    %v110 = vunpack.c.l.b16 %v34
    %v111 = vunpack.c.h.b16 %v34
    %v112 = vunpack.c.l.b16 %v35
    %v113 = vunpack.c.h.b16 %v35
    %v114 = vunpack.c.l.b16 %v36
    %v115 = vunpack.c.h.b16 %v36
    %v116 = vunpack.c.l.b16 %v37
    %v117 = vunpack.c.h.b16 %v37
    %v118 = vunpack.c.l.b16 %v38
    %v119 = vunpack.c.h.b16 %v38
    %v120 = vunpack.c.l.b16 %v39
    %v121 = vunpack.c.h.b16 %v39
    %v122 = vunpack.c.l.b16 %v40
    %v123 = vunpack.c.h.b16 %v40
    %v124 = vunpack.c.l.b16 %v41
    %v125 = vunpack.c.h.b16 %v41
    %v126 = vunpack.c.l.b16 %v42
    %v127 = vunpack.c.h.b16 %v42
    %v128 = vunpack.c.l.b16 %v43
    %v129 = vunpack.c.h.b16 %v43
    %v130 = vunpack.c.l.b16 %v44
    %v131 = vunpack.c.h.b16 %v44
    %v132 = vunpack.c.l.b16 %v45
    %v133 = vunpack.c.h.b16 %v45
    %v134 = vunpack.c.l.b16 %v46
    %v135 = vunpack.c.h.b16 %v46
    %v136 = vunpack.c.l.b16 %v47
    %v137 = vunpack.c.h.b16 %v47
    %v138 = vunpack.c.l.b16 %v48
    %v139 = vunpack.c.h.b16 %v48
    %v140 = vunpack.c.l.b16 %v49
    %v141 = vunpack.c.h.b16 %v49
    %v142 = vunpack.c.l.b16 %v50
    %v143 = vunpack.c.h.b16 %v50
    %v144 = vunpack.c.l.b16 %v51
    %v145 = vunpack.c.h.b16 %v51
    %v146 = vunpack.c.l.b16 %v52
    %v147 = vunpack.c.h.b16 %v52
    %v148 = vunpack.c.l.b16 %v53
    %v149 = vunpack.c.h.b16 %v53
    %v150 = vunpack.c.l.b16 %v54
    %v151 = vunpack.c.h.b16 %v54
    %v152 = vunpack.c.l.b16 %v55
    %v153 = vunpack.c.h.b16 %v55
    %v154 = vunpack.c.l.b16 %v56
    %v155 = vunpack.c.h.b16 %v56
    %v156 = vunpack.c.l.b16 %v57
    %v157 = vunpack.c.h.b16 %v57
    %v158 = vunpack.c.l.b16 %v58
    %v159 = vunpack.c.h.b16 %v58
    %v160 = vunpack.c.l.b16 %v59
    %v161 = vunpack.c.h.b16 %v59
    %v162 = vpack.c.b16 %v102, %v98
    %v163 = vpack.c.b16 %v103, %v99
    %v164 = vpack.c.b16 %v104, %v100
    %v165 = vpack.c.b16 %v105, %v101
    %v166 = vpack.c.b16 %v110, %v106
    %v167 = vpack.c.b16 %v111, %v107
    %v168 = vpack.c.b16 %v112, %v108
    %v169 = vpack.c.b16 %v113, %v109
    %v170 = vpack.c.b16 %v118, %v114
    %v171 = vpack.c.b16 %v119, %v115
    %v172 = vpack.c.b16 %v120, %v116
    %v173 = vpack.c.b16 %v121, %v117
    %v174 = vpack.c.b16 %v126, %v122
    %v175 = vpack.c.b16 %v127, %v123
    %v176 = vpack.c.b16 %v128, %v124
    %v177 = vpack.c.b16 %v129, %v125
    %v178 = vpack.c.b16 %v134, %v130
    %v179 = vpack.c.b16 %v135, %v131
    %v180 = vpack.c.b16 %v136, %v132
    %v181 = vpack.c.b16 %v137, %v133
    %v182 = vpack.c.b16 %v142, %v138
    %v183 = vpack.c.b16 %v143, %v139
    %v184 = vpack.c.b16 %v144, %v140
    %v185 = vpack.c.b16 %v145, %v141
    %v186 = vpack.c.b16 %v150, %v146
    %v187 = vpack.c.b16 %v151, %v147
    %v188 = vpack.c.b16 %v152, %v148
    %v189 = vpack.c.b16 %v153, %v149
    %v190 = vpack.c.b16 %v158, %v154
    %v191 = vpack.c.b16 %v159, %v155
    %v192 = vpack.c.b16 %v160, %v156
    %v193 = vpack.c.b16 %v161, %v157
    %226 = vmatprep.subr.bf16.mxu0 %v163
    %227 = vmatpush1.bf16.msra.mxu0 %v162
    %228 = vmatprep.subr.bf16.mxu0 %v167
    %229 = vmatpush1.bf16.msra.mxu0 %v166
    %230 = vmatprep.subr.bf16.mxu0 %v171
    %231 = vmatpush1.bf16.msra.mxu0 %v170
    %232 = vmatprep.subr.bf16.mxu0 %v175
    %233 = vmatpush1.bf16.msra.mxu0 %v174
    %234 = vmatprep.subr.bf16.mxu0 %v179
    %235 = vmatpush1.bf16.msra.mxu0 %v178
    %236 = vmatprep.subr.bf16.mxu0 %v183
    %237 = vmatpush1.bf16.msra.mxu0 %v182
    %238 = vmatprep.subr.bf16.mxu0 %v187
    %239 = vmatpush1.bf16.msra.mxu0 %v186
    %240 = vmatprep.subr.bf16.mxu0 %v191
    %241 = vmatpush1.bf16.msra.mxu0 %v190
    %242 = vmatprep.subr.bf16.mxu0 0
    %243 = vmatpush1.bf16.msra.mxu0 0
    %244 = vmatprep.subr.bf16.mxu0 0
    %245 = vmatpush1.bf16.msra.mxu0 0
    %246 = vmatprep.subr.bf16.mxu0 0
    %247 = vmatpush1.bf16.msra.mxu0 0
    %248 = vmatprep.subr.bf16.mxu0 0
    %249 = vmatpush1.bf16.msra.mxu0 0
    %250 = vmatprep.subr.bf16.mxu0 0
    %251 = vmatpush1.bf16.msra.mxu0 0
    %252 = vmatprep.subr.bf16.mxu0 0
    %253 = vmatpush1.bf16.msra.mxu0 0
    %254 = vmatprep.subr.bf16.mxu0 0
    %255 = vmatpush1.bf16.msra.mxu0 0
    %256 = vmatprep.subr.bf16.mxu0 0
    %257 = vmatpush1.bf16.msra.mxu0 0
    %258 = vmatprep.mubr.bf16.mxu0 0
    %259 = vmatmul.mubr.bf16.gmra.mrb[0].mxu0 %v64
    %v260 = vpop.f32.mrb[0].mxu0
    %v261 = vadd.f32 0.0, %v260
    %v262 = vpop.f32.mrb[0].mxu0
    %v263 = vadd.f32 0.0, %v262
    %v264 = vpop.f32.mrb[0].mxu0
    %v265 = vadd.f32 0.0, %v264
    %v266 = vpop.f32.mrb[0].mxu0
    %v267 = vadd.f32 0.0, %v266
    %268 = vdwg.mxu0
    %269 = vmatprep.subr.bf16.mxu0 %v165
    %270 = vmatpush1.bf16.msra.mxu0 %v164
    %271 = vmatprep.subr.bf16.mxu0 %v169
    %272 = vmatpush1.bf16.msra.mxu0 %v168
    %273 = vmatprep.subr.bf16.mxu0 %v173
    %274 = vmatpush1.bf16.msra.mxu0 %v172
    %275 = vmatprep.subr.bf16.mxu0 %v177
    %276 = vmatpush1.bf16.msra.mxu0 %v176
    %277 = vmatprep.subr.bf16.mxu0 %v181
    %278 = vmatpush1.bf16.msra.mxu0 %v180
    %279 = vmatprep.subr.bf16.mxu0 %v185
    %280 = vmatpush1.bf16.msra.mxu0 %v184
    %281 = vmatprep.subr.bf16.mxu0 %v189
    %282 = vmatpush1.bf16.msra.mxu0 %v188
    %283 = vmatprep.subr.bf16.mxu0 %v193
    %284 = vmatpush1.bf16.msra.mxu0 %v192
    %285 = vmatprep.subr.bf16.mxu0 0
    %286 = vmatpush1.bf16.msra.mxu0 0
    %287 = vmatprep.subr.bf16.mxu0 0
    %288 = vmatpush1.bf16.msra.mxu0 0
    %289 = vmatprep.subr.bf16.mxu0 0
    %290 = vmatpush1.bf16.msra.mxu0 0
    %291 = vmatprep.subr.bf16.mxu0 0
    %292 = vmatpush1.bf16.msra.mxu0 0
    %293 = vmatprep.subr.bf16.mxu0 0
    %294 = vmatpush1.bf16.msra.mxu0 0
    %295 = vmatprep.subr.bf16.mxu0 0
    %296 = vmatpush1.bf16.msra.mxu0 0
    %297 = vmatprep.subr.bf16.mxu0 0
    %298 = vmatpush1.bf16.msra.mxu0 0
    %299 = vmatprep.subr.bf16.mxu0 0
    %300 = vmatpush1.bf16.msra.mxu0 0
    %301 = vmatprep.mubr.bf16.mxu0 0
    %302 = vmatmul.mubr.bf16.gmra.mrb[0].mxu0 %v64
    %v303 = vpop.f32.mrb[0].mxu0
    %v304 = vadd.f32 0.0, %v303
    %v305 = vpop.f32.mrb[0].mxu0
    %v306 = vadd.f32 0.0, %v305
    %v307 = vpop.f32.mrb[0].mxu0
    %v308 = vadd.f32 0.0, %v307
    %v309 = vpop.f32.mrb[0].mxu0
    %v310 = vadd.f32 0.0, %v309
    %311 = vdwg.mxu0
    %312 = vst [vmem:[%s2] sm:$0xff] %v261
    %313 = vst [vmem:[%s2 + $0x8] sm:$0xff] %v263
    %314 = vst [vmem:[%s2 + $0x10] sm:$0xff] %v304
    %315 = vst [vmem:[%s2 + $0x18] sm:$0xff] %v306
    %316 = vst [vmem:[%s2 + $0x20] sm:$0xff] %v265
    %317 = vst [vmem:[%s2 + $0x28] sm:$0xff] %v267
    %318 = vst [vmem:[%s2 + $0x30] sm:$0xff] %v308
    %319 = vst [vmem:[%s2 + $0x38] sm:$0xff] %v310
    // Predicated region
    $region14: #{_forward.1} parent=1 // pred_check
      _
    $region15: #{_forward.1} parent=1 // pred_check_branch
      %321 = sbr.rel (0) target = $region17
    $region16: #{_forward.1} parent=1 // pred_region
      _
    $region17: #{_forward.1} parent=1 // pred_fallthru
      _
    // Predicated region
    $region18: #{_forward.1} parent=1 // pred_check
      _
    $region19: #{_forward.1} parent=1 // pred_check_branch
      %323 = sbr.rel (0) target = $region21
    $region20: #{_forward.1} parent=1 // pred_region
      _
    $region21: #{_forward.1} parent=1 // pred_fallthru
      _
    %324 = vsyncpa [#allocation3], 1

</llo_original>
